<compile_context>
chip_gen: v6e
topology: v6e:2x2x1
jax: 0.10.0
libtpu: 0.0.40
codegen_flags: <defaults>
</compile_context>

<pallas_src>
import jax
import jax.numpy as jnp
from jax.experimental import pallas as pl
from jax.experimental.pallas import tpu as pltpu


# ----------------------------------------------------------------------------
# Kernel
# ----------------------------------------------------------------------------
def _mlp_kernel(x_ref, w1t_ref, b1_ref, w2t_ref, b2_ref, o_ref):
    # x_ref:   [BB, L, TN]  bf16  (lanes = padded nodes)
    # w1t_ref: [H, L]       bf16  (resident across the whole grid)
    # b1_ref:  [H, 1]       f32   (resident)
    # w2t_ref: [P, H]       bf16  (resident)
    # b2_ref:  [P, 1]       f32   (resident)
    # o_ref:   [BB, P, TN]  f32   (lane-dense stores)
    w1t = w1t_ref[...]
    b1 = b1_ref[...]
    w2t = w2t_ref[...]
    b2 = b2_ref[...]
    bb = x_ref.shape[0]
    # BB is small (<= 16) and static: unrolled loop of plain 2-D MXU matmuls
    # keeps the lowering simple and gives the scheduler full visibility.
    for b in range(bb):
        h = jnp.dot(w1t, x_ref[b], preferred_element_type=jnp.float32)   # [H, TN]
        h = jnp.maximum(h + b1, 0.0)                                     # bias+ReLU
        o = jnp.dot(w2t, h.astype(jnp.bfloat16),
                    preferred_element_type=jnp.float32)                  # [P, TN]
        o_ref[b] = (o + b2).astype(o_ref.dtype)


# ----------------------------------------------------------------------------
# Tiling helpers
# ----------------------------------------------------------------------------
def _round_up(x, m):
    return (x + m - 1) // m * m


def _divisors_desc(n):
    return [d for d in range(n, 0, -1) if n % d == 0]


def _vmem_capacity_bytes():
    try:
        return int(pltpu.get_tpu_info().vmem_capacity_bytes)
    except Exception:
        return 64 << 20  # conservative default (v7x per-TensorCore VMEM)


def _choose_tiles(B, Np, L, P, vmem_bytes):
    """Pick (BB, TN): batch block and node (lane) tile.

    Goals: multi-MiB x+out bytes per grid step, double-buffered footprint
    well inside VMEM, >= 2 grid steps (v7x megacore), TN a multiple of 128
    (Np is already padded to one) so stores stay lane-dense.
    """
    # Streaming bytes per (batch, node) column: bf16 x in + f32 out, with the
    # L / P sublane padding the hardware layout will actually allocate.
    col_bytes = _round_up(L, 16) * 2 + _round_up(P, 8) * 4

    stream_budget = max(vmem_bytes // 3, 2 << 20)      # headroom for weights etc.
    max_step_bytes = min(stream_budget // 2, 8 << 20)  # /2: double buffering
    min_step_bytes = 1 << 20
    max_cols = max(128, max_step_bytes // col_bytes)

    # Node tile: largest multiple of 128 dividing Np that fits the step budget.
    m = Np // 128
    tn_cands = [128 * d for d in _divisors_desc(m)]    # descending
    tn = next((t for t in tn_cands if t <= max_cols), 128)

    # Batch block: largest divisor of B (capped at 16 so the unrolled in-kernel
    # batch loop stays short) that keeps the step under budget.
    bb = next((d for d in _divisors_desc(B) if d <= 16 and d * tn <= max_cols), 1)

    def steps(bb_, tn_):
        return (B // bb_) * (Np // tn_)

    # Prefer >= 8 grid steps (both v7x TCs busy + pipeline overlap) as long as
    # each step still streams >= ~1 MiB.
    while steps(bb, tn) < 8:
        nxt_tn = next((t for t in tn_cands if t < tn), None)
        if nxt_tn is not None and bb * nxt_tn * col_bytes >= min_step_bytes:
            tn = nxt_tn
            continue
        nxt_bb = next((d for d in _divisors_desc(B) if d < bb), None)
        if nxt_bb is not None and nxt_bb * tn * col_bytes >= min_step_bytes:
            bb = nxt_bb
            continue
        break

    # Hard requirement: at least 2 steps when the shapes allow it, so both v7x
    # TensorCores get work even for tiny problems.
    if steps(bb, tn) < 2:
        nxt_tn = next((t for t in tn_cands if t < tn), None)
        if nxt_tn is not None:
            tn = nxt_tn
        elif bb > 1:
            bb = max(d for d in _divisors_desc(B) if d < bb)

    return bb, tn


# ----------------------------------------------------------------------------
# Wrapper
# ----------------------------------------------------------------------------
@jax.jit
def mlp_forward(history_data, w1, b1, w2, b2):
    """history_data: [B, L, N, C] f32 -> prediction: [B, P, N, 1] f32."""
    B, L, N, _C = history_data.shape
    H = w1.shape[1]
    P = w2.shape[1]

    # Channel-0 slice + bf16 cast.  The cast halves the dominant input DMA
    # stream; allow_input_fusion (below) lets XLA fold this producer chain
    # directly into the Pallas operand so no intermediate array is written.
    x = history_data[..., 0].astype(jnp.bfloat16)               # [B, L, N]

    # Pad the node axis to a multiple of 128 -> lane-dense stores everywhere.
    Np = _round_up(N, 128)
    if Np != N:
        x = jnp.pad(x, ((0, 0), (0, 0), (0, Np - N)))

    vmem_cap = _vmem_capacity_bytes()
    BB, TN = _choose_tiles(B, Np, L, P, vmem_cap)
    grid = (B // BB, Np // TN)

    # Kernel-side parameter layouts (tiny one-time casts, folded under jit).
    w1t = jnp.transpose(w1).astype(jnp.bfloat16)                 # [H, L]
    w2t = jnp.transpose(w2).astype(jnp.bfloat16)                 # [P, H]
    b1c = b1.reshape(H, 1).astype(jnp.float32)                   # [H, 1]
    b2c = b2.reshape(P, 1).astype(jnp.float32)                   # [P, 1]

    # Explicit VMEM limit sized from the actual double-buffered blocks (keeps
    # v7x's 64 MiB happy, raises the scoped default where useful).
    x_blk_bytes = BB * _round_up(L, 16) * TN * 2
    o_blk_bytes = BB * _round_up(P, 8) * TN * 4
    vmem_limit = int(min(vmem_cap,
                         max(2 * (x_blk_bytes + o_blk_bytes) + (4 << 20),
                             16 << 20)))

    cost = pl.CostEstimate(
        flops=2 * B * Np * (L * H + H * P),
        transcendentals=0,
        bytes_accessed=(B * L * Np * 2 + B * P * Np * 4
                        + 2 * (H * L + P * H) + 4 * (H + P)),
    )

    out = pl.pallas_call(
        _mlp_kernel,
        out_shape=jax.ShapeDtypeStruct((B, P, Np), jnp.float32),
        grid_spec=pltpu.PrefetchScalarGridSpec(
            num_scalar_prefetch=0,
            grid=grid,
            in_specs=[
                pl.BlockSpec((BB, L, TN), lambda b, n: (b, 0, n)),  # x tile
                pl.BlockSpec((H, L), lambda b, n: (0, 0)),          # W1^T resident
                pl.BlockSpec((H, 1), lambda b, n: (0, 0)),          # b1 resident
                pl.BlockSpec((P, H), lambda b, n: (0, 0)),          # W2^T resident
                pl.BlockSpec((P, 1), lambda b, n: (0, 0)),          # b2 resident
            ],
            out_specs=pl.BlockSpec((BB, P, TN), lambda b, n: (b, 0, n)),
        ),
        compiler_params=pltpu.CompilerParams(
            dimension_semantics=("parallel", "parallel"),
            allow_input_fusion=[True, False, False, False, False],
            vmem_limit_bytes=vmem_limit,
        ),
        cost_estimate=cost,
    )(x, w1t, b1c, w2t, b2c)

    out = out[:, :, :N]          # drop node padding
    return out[..., None]        # [B, P, N, 1] (metadata-only unsqueeze)


# ----------------------------------------------------------------------------
# Parameter init (nn.Linear-style)
# ----------------------------------------------------------------------------
def init_params(key, history_seq_len, prediction_seq_len, hidden_dim):
    """Deterministic nn.Linear-style init (uniform(-1/sqrt(fan_in), 1/sqrt(fan_in)))."""
    k1, k2, k3, k4 = jax.random.split(key, 4)
    bound1 = 1.0 / jnp.sqrt(history_seq_len)
    bound2 = 1.0 / jnp.sqrt(hidden_dim)
    # Stored as (in, out): x @ W  ==  PyTorch x @ weight.T with weight (out, in).
    w1 = jax.random.uniform(k1, (history_seq_len, hidden_dim), jnp.float32,
                            -bound1, bound1)
    b1 = jax.random.uniform(k2, (hidden_dim,), jnp.float32, -bound1, bound1)
    w2 = jax.random.uniform(k3, (hidden_dim, prediction_seq_len), jnp.float32,
                            -bound2, bound2)
    b2 = jax.random.uniform(k4, (prediction_seq_len,), jnp.float32, -bound2, bound2)
    return w1, b1, w2, b2


if __name__ == "__main__":
    # Small shapes consistent with the forward: history_data [B, L, N, C].
    B, L, N, C = 2, 12, 8, 3        # history_seq_len = L = 12
    P = 12                          # prediction_seq_len
    H = 32                          # hidden_dim

    key = jax.random.PRNGKey(0)
    k_in, k_param = jax.random.split(key)
    history_data = jax.random.normal(k_in, (B, L, N, C), jnp.float32)
    future_data = jnp.zeros((B, P, N, C), jnp.float32)  # unused, as in the module

    w1, b1, w2, b2 = init_params(k_param, L, P, H)

    prediction = mlp_forward(history_data, w1, b1, w2, b2)
    jax.block_until_ready(prediction)
    assert prediction.shape == (B, P, N, 1), prediction.shape

    # Reference with matching precision (bf16 matmul operands, f32 accumulation).
    xb = jnp.transpose(history_data[..., 0], (0, 2, 1)).astype(jnp.bfloat16)  # [B,N,L]
    h_ref = jnp.einsum("bnl,lh->bnh", xb, w1.astype(jnp.bfloat16),
                       preferred_element_type=jnp.float32) + b1
    h_ref = jnp.maximum(h_ref, 0.0)
    o_ref = jnp.einsum("bnh,hp->bnp", h_ref.astype(jnp.bfloat16),
                       w2.astype(jnp.bfloat16),
                       preferred_element_type=jnp.float32) + b2
    ref = jnp.transpose(o_ref, (0, 2, 1))[..., None]                          # [B,P,N,1]
    max_err = float(jnp.max(jnp.abs(prediction - ref)))
    assert jnp.allclose(prediction, ref, atol=1e-3, rtol=1e-3), max_err

    # Looser sanity check against the exact f32 PyTorch semantics (the kernel
    # deliberately uses bf16 matmul operands for HBM-traffic reasons).
    xf = jnp.transpose(history_data[..., 0], (0, 2, 1))                       # [B,N,L]
    hf = jnp.maximum(xf @ w1 + b1, 0.0)
    of = jnp.transpose(hf @ w2 + b2, (0, 2, 1))[..., None]                    # [B,P,N,1]
    max_err_f32 = float(jnp.max(jnp.abs(prediction - of)))
    assert jnp.allclose(prediction, of, atol=1e-1, rtol=1e-1), max_err_f32

    print("KERNEL_OK")
</pallas_src>

<mosaic_0001>
module attributes {stable_mosaic.version = 11 : i64} {
  func.func @_mlp_kernel(%arg0: i32, %arg1: i32, %arg2: memref<1x12x128xbf16, #tpu.memory_space<vmem>>, %arg3: memref<32x12xbf16, #tpu.memory_space<vmem>>, %arg4: memref<32x1xf32, #tpu.memory_space<vmem>>, %arg5: memref<12x32xbf16, #tpu.memory_space<vmem>>, %arg6: memref<12x1xf32, #tpu.memory_space<vmem>>, %arg7: memref<1x12x128xf32, #tpu.memory_space<vmem>>) attributes {dimension_semantics = [#tpu.dimension_semantics<parallel>, #tpu.dimension_semantics<parallel>], iteration_bounds = array<i64: 2, 1>, scalar_prefetch = 0 : i64, scratch_operands = 0 : i64, tpu.core_type = #tpu.core_type<tc>, window_params = [{transform_indices = @transform_0, window_bounds = array<i64: 1, 12, 128>}, {pipeline_mode = #tpu.pipeline_mode<synchronous>, transform_indices = @transform_1, window_bounds = array<i64: 32, 12>}, {pipeline_mode = #tpu.pipeline_mode<synchronous>, transform_indices = @transform_2, window_bounds = array<i64: 32, 1>}, {pipeline_mode = #tpu.pipeline_mode<synchronous>, transform_indices = @transform_3, window_bounds = array<i64: 12, 32>}, {pipeline_mode = #tpu.pipeline_mode<synchronous>, transform_indices = @transform_4, window_bounds = array<i64: 12, 1>}, {transform_indices = @transform_5, window_bounds = array<i64: 1, 12, 128>}]} {
    %c0 = arith.constant 0 : index
    %c0_0 = arith.constant 0 : index
    %0 = vector.load %arg3[%c0, %c0_0] : memref<32x12xbf16, #tpu.memory_space<vmem>>, vector<32x12xbf16>
    %c0_1 = arith.constant 0 : index
    %c0_2 = arith.constant 0 : index
    %1 = vector.load %arg4[%c0_1, %c0_2] : memref<32x1xf32, #tpu.memory_space<vmem>>, vector<32x1xf32>
    %c0_3 = arith.constant 0 : index
    %c0_4 = arith.constant 0 : index
    %2 = vector.load %arg5[%c0_3, %c0_4] : memref<12x32xbf16, #tpu.memory_space<vmem>>, vector<12x32xbf16>
    %c0_5 = arith.constant 0 : index
    %c0_6 = arith.constant 0 : index
    %3 = vector.load %arg6[%c0_5, %c0_6] : memref<12x1xf32, #tpu.memory_space<vmem>>, vector<12x1xf32>
    %c0_7 = arith.constant 0 : index
    %c0_8 = arith.constant 0 : index
    %c0_9 = arith.constant 0 : index
    %4 = vector.load %arg2[%c0_7, %c0_8, %c0_9] : memref<1x12x128xbf16, #tpu.memory_space<vmem>>, vector<1x12x128xbf16>
    %5 = vector.shape_cast %4 : vector<1x12x128xbf16> to vector<12x128xbf16>
    %cst = arith.constant dense<0.000000e+00> : vector<32x128xf32>
    %6 = tpu.matmul %0, %5, %cst {dimension_numbers = #tpu.dot_dimension_numbers<[1], [0], [0], [1], [0, 0, 1, 1], [], []>} : vector<32x12xbf16>, vector<12x128xbf16>, vector<32x128xf32> -> vector<32x128xf32>
    %7 = vector.broadcast %1 : vector<32x1xf32> to vector<32x128xf32>
    %8 = arith.addf %6, %7 : vector<32x128xf32>
    %cst_10 = arith.constant 0.000000e+00 : f32
    %9 = vector.broadcast %cst_10 : f32 to vector<32x128xf32>
    %10 = arith.maximumf %8, %9 : vector<32x128xf32>
    %11 = arith.truncf %10 : vector<32x128xf32> to vector<32x128xbf16>
    %cst_11 = arith.constant dense<0.000000e+00> : vector<12x128xf32>
    %12 = tpu.matmul %2, %11, %cst_11 {dimension_numbers = #tpu.dot_dimension_numbers<[1], [0], [0], [1], [0, 0, 1, 1], [], []>} : vector<12x32xbf16>, vector<32x128xbf16>, vector<12x128xf32> -> vector<12x128xf32>
    %13 = vector.broadcast %3 : vector<12x1xf32> to vector<12x128xf32>
    %14 = arith.addf %12, %13 : vector<12x128xf32>
    %c0_12 = arith.constant 0 : index
    %c0_13 = arith.constant 0 : index
    %c0_14 = arith.constant 0 : index
    %15 = vector.load %arg7[%c0_12, %c0_13, %c0_14] : memref<1x12x128xf32, #tpu.memory_space<vmem>>, vector<1x12x128xf32>
    %16 = vector.shape_cast %15 : vector<1x12x128xf32> to vector<12x128xf32>
    %17 = vector.shape_cast %14 : vector<12x128xf32> to vector<1x12x128xf32>
    tpu.vector_store %arg7[%c0_12, %c0_13, %c0_14], %17 {strides = array<i32>} : memref<1x12x128xf32, #tpu.memory_space<vmem>>, vector<1x12x128xf32>,
    return
  }
  func.func @transform_0(%arg0: i32, %arg1: i32) -> (i32, i32, i32) {
    %c0_i32 = arith.constant 0 : i32
    %c0_i32_0 = arith.constant 0 : i32
    return %arg0, %c0_i32, %arg1 : i32, i32, i32
  }
  func.func @transform_1(%arg0: i32, %arg1: i32) -> (i32, i32) {
    %c0_i32 = arith.constant 0 : i32
    %c0_i32_0 = arith.constant 0 : i32
    %c0_i32_1 = arith.constant 0 : i32
    return %c0_i32, %c0_i32_0 : i32, i32
  }
  func.func @transform_2(%arg0: i32, %arg1: i32) -> (i32, i32) {
    %c0_i32 = arith.constant 0 : i32
    %c0_i32_0 = arith.constant 0 : i32
    %c0_i32_1 = arith.constant 0 : i32
    return %c0_i32, %c0_i32_0 : i32, i32
  }
  func.func @transform_3(%arg0: i32, %arg1: i32) -> (i32, i32) {
    %c0_i32 = arith.constant 0 : i32
    %c0_i32_0 = arith.constant 0 : i32
    %c0_i32_1 = arith.constant 0 : i32
    return %c0_i32, %c0_i32_0 : i32, i32
  }
  func.func @transform_4(%arg0: i32, %arg1: i32) -> (i32, i32) {
    %c0_i32 = arith.constant 0 : i32
    %c0_i32_0 = arith.constant 0 : i32
    %c0_i32_1 = arith.constant 0 : i32
    return %c0_i32, %c0_i32_0 : i32, i32
  }
  func.func @transform_5(%arg0: i32, %arg1: i32) -> (i32, i32, i32) {
    %c0_i32 = arith.constant 0 : i32
    %c0_i32_0 = arith.constant 0 : i32
    return %arg0, %c0_i32, %arg1 : i32, i32, i32
  }
}

</mosaic_0001>

<llo_original>
// kernel: mlp_forward.2
$region0: #{mlp_forward.2}
  #allocation0 [shape = 'u32[]', space=smem, size = 0x4, offset = 0x4, fixed_abs, tag = 'smem constant byte address 0x4 - core index']
  #allocation1 [shape = 'u32[144,128]{1,0:T(1,128)}', space=vmem, size = 0x12000, scoped, tag = 'internal scratch']
  #allocation2 [shape = 'u32[2048]{0}', space=vmem, size = 0x2000, scoped, tag = 'scoped memory for mlp_forward.2']
  #allocation3 [shape = 'u32[2048]{0}', space=vmem, size = 0x2000, scoped, tag = 'scoped memory for mlp_forward.2']
  #allocation4 [shape = 'u32[2048]{0}', space=vmem, size = 0x2000, scoped, tag = 'scoped memory for mlp_forward.2']
  #allocation5 [shape = 'u32[2048]{0}', space=vmem, size = 0x2000, scoped, tag = 'scoped memory for mlp_forward.2']
  #allocation6 [shape = 'u32[2048]{0}', space=vmem, size = 0x2000, scoped, tag = 'scoped memory for mlp_forward.2']
  %s0 = inlined_call_operand.vmem [shape: bf16[32,12], index: 0, kind: input, shape index: {}]
  %s1 = inlined_call_operand.vmem [shape: f32[32,1], index: 1, kind: input, shape index: {}]
  %s2 = inlined_call_operand.vmem [shape: bf16[12,32], index: 2, kind: input, shape index: {}]
  %s3 = inlined_call_operand.vmem [shape: f32[12,1], index: 3, kind: input, shape index: {}]
  %s4 = inlined_call_operand.vmem [shape: bf16[2,12,8], index: 4, kind: input, shape index: {}]
  %s5 = inlined_call_operand.<no memory space> [shape: bf16[], index: 5, kind: input, shape index: {}]
  %s6 = inlined_call_operand.vmem [shape: f32[2,12,128], index: 6, kind: output, shape index: {}]
  %s7 = sld [smem:[#allocation0]]
  $region53: #{mlp_forward.2} parent=0
    _
  %s9 = ssub.s32 1, %s7
  %s10 = scalar_select 0, %s9, %s7
  %v11 = vstv %s5
  %v12 = vunpack.i.l.bf16 %v11
  %v14 = vunpack.i.h.bf16 %v11
  loop: start=0, step=1, limit=4
  $region2: #{mlp_forward.2} parent=0 // loop_pre_header
    _
  $region3: #{mlp_forward.2} parent=0 // loop_header
    %s17 = sphi 0, %s21
    %p18 = scmp.ge.s32.totalorder %s17, 4
    %s24 = sphi 0, %s36
    %s25 = sphi 0, %s32
    %s26 = sphi 0, %s24
    %s27 = sphi 0, %s25
    %s28 = sphi 0, %s26
    %s29 = sphi 0, %s27
    %s41 = sphi 0, %s43
    %s44 = sphi 0, %s41
    %s45 = sphi 0, %s44
    %s61 = sphi 0, %s45
    %s65 = sphi 0, %s65
    %s67 = sphi 0, %s65
    %s68 = sphi 0, %s67
    %s82 = sphi 0, %s68
    %s86 = sphi 0, %s86
    %s88 = sphi 0, %s86
    %s89 = sphi 0, %s88
    %s103 = sphi 0, %s89
    %s107 = sphi 0, %s107
    %s109 = sphi 0, %s107
    %s110 = sphi 0, %s109
    %s124 = sphi 0, %s110
    %s128 = sphi 0, %s128
    %s130 = sphi 0, %s128
    %s131 = sphi 0, %s130
    %s145 = sphi 0, %s131
    %s153 = sphi 0, %s155
    %s156 = sphi 0, %s153
    %s157 = sphi 0, %s156
    %s173 = sphi 0, %s157
  $region4: #{mlp_forward.2} parent=0 // loop_header_branch
    %20 = sbr.rel (%p18) target = $region8
  $region5: #{mlp_forward.2} parent=0 // loop_body
    %s22 = ssub.s32 %s17, 1
    %s23 = ssub.s32 %s17, 2
    %s30 = sadd.s32 1, %s25
    %p31 = scmp.ge.s32.totalorder %s30, 1
    %s32 = scalar_select %p31, 0, %s30
    %s33 = sadd.s32 1, %s24
    %s34 = scalar_select %p31, %s33, %s24
    %p35 = scmp.ge.s32.totalorder %s34, 2
    %s36 = scalar_select %p35, 0, %s34
    %s37 = ssub.s32 %s24, %s36
    %s38 = ssub.s32 %s25, %s32
    %s39 = sor.u32 %s37, %s38
    %p40 = scmp.eq.s32.totalorder %s39, 0
    %s42 = sadd.s32 %s41, 1
    %s43 = scalar_select %p40, %s41, %s42
    %p46 = pneg %p40
    %p47 = scmp.eq.s32.totalorder %s17, 1
    %p48 = por %p46, %p47
    %p49 = scmp.ne.s32.totalorder %s41, %s44
    %p50 = scmp.eq.s32.totalorder %s17, 0
    %p51 = por %p49, %p50
    %p52 = scmp.ne.s32.totalorder %s41, %s44
    %p53 = scmp.eq.s32.totalorder %s22, 1
    %p54 = por %p52, %p53
    %p55 = scmp.ne.s32.totalorder %s44, %s45
    %p56 = scmp.eq.s32.totalorder %s22, 0
    %p57 = por %p55, %p56
    %p58 = scmp.ne.s32.totalorder %s44, %s45
    %p59 = scmp.eq.s32.totalorder %s23, 1
    %p60 = por %p58, %p59
    %p62 = scmp.ne.s32.totalorder %s45, %s61
    %p63 = scmp.eq.s32.totalorder %s23, 0
    %p64 = por %p62, %p63
    %s66 = sadd.s32 %s65, 1
    %p69 = scmp.eq.s32.totalorder %s17, 1
    %p70 = scmp.ne.s32.totalorder %s65, %s67
    %p71 = scmp.eq.s32.totalorder %s17, 0
    %p72 = por %p70, %p71
    %p73 = scmp.ne.s32.totalorder %s65, %s67
    %p74 = scmp.eq.s32.totalorder %s22, 1
    %p75 = por %p73, %p74
    %p76 = scmp.ne.s32.totalorder %s67, %s68
    %p77 = scmp.eq.s32.totalorder %s22, 0
    %p78 = por %p76, %p77
    %p79 = scmp.ne.s32.totalorder %s67, %s68
    %p80 = scmp.eq.s32.totalorder %s23, 1
    %p81 = por %p79, %p80
    %p83 = scmp.ne.s32.totalorder %s68, %s82
    %p84 = scmp.eq.s32.totalorder %s23, 0
    %p85 = por %p83, %p84
    %s87 = sadd.s32 %s86, 1
    %p90 = scmp.eq.s32.totalorder %s17, 1
    %p91 = scmp.ne.s32.totalorder %s86, %s88
    %p92 = scmp.eq.s32.totalorder %s17, 0
    %p93 = por %p91, %p92
    %p94 = scmp.ne.s32.totalorder %s86, %s88
    %p95 = scmp.eq.s32.totalorder %s22, 1
    %p96 = por %p94, %p95
    %p97 = scmp.ne.s32.totalorder %s88, %s89
    %p98 = scmp.eq.s32.totalorder %s22, 0
    %p99 = por %p97, %p98
    %p100 = scmp.ne.s32.totalorder %s88, %s89
    %p101 = scmp.eq.s32.totalorder %s23, 1
    %p102 = por %p100, %p101
    %p104 = scmp.ne.s32.totalorder %s89, %s103
    %p105 = scmp.eq.s32.totalorder %s23, 0
    %p106 = por %p104, %p105
    %s108 = sadd.s32 %s107, 1
    %p111 = scmp.eq.s32.totalorder %s17, 1
    %p112 = scmp.ne.s32.totalorder %s107, %s109
    %p113 = scmp.eq.s32.totalorder %s17, 0
    %p114 = por %p112, %p113
    %p115 = scmp.ne.s32.totalorder %s107, %s109
    %p116 = scmp.eq.s32.totalorder %s22, 1
    %p117 = por %p115, %p116
    %p118 = scmp.ne.s32.totalorder %s109, %s110
    %p119 = scmp.eq.s32.totalorder %s22, 0
    %p120 = por %p118, %p119
    %p121 = scmp.ne.s32.totalorder %s109, %s110
    %p122 = scmp.eq.s32.totalorder %s23, 1
    %p123 = por %p121, %p122
    %p125 = scmp.ne.s32.totalorder %s110, %s124
    %p126 = scmp.eq.s32.totalorder %s23, 0
    %p127 = por %p125, %p126
    %s129 = sadd.s32 %s128, 1
    %p132 = scmp.eq.s32.totalorder %s17, 1
    %p133 = scmp.ne.s32.totalorder %s128, %s130
    %p134 = scmp.eq.s32.totalorder %s17, 0
    %p135 = por %p133, %p134
    %p136 = scmp.ne.s32.totalorder %s128, %s130
    %p137 = scmp.eq.s32.totalorder %s22, 1
    %p138 = por %p136, %p137
    %p139 = scmp.ne.s32.totalorder %s130, %s131
    %p140 = scmp.eq.s32.totalorder %s22, 0
    %p141 = por %p139, %p140
    %p142 = scmp.ne.s32.totalorder %s130, %s131
    %p143 = scmp.eq.s32.totalorder %s23, 1
    %p144 = por %p142, %p143
    %p146 = scmp.ne.s32.totalorder %s131, %s145
    %p147 = scmp.eq.s32.totalorder %s23, 0
    %p148 = por %p146, %p147
    %s149 = ssub.s32 %s24, %s36
    %s150 = ssub.s32 %s25, %s32
    %s151 = sor.u32 %s149, %s150
    %p152 = scmp.eq.s32.totalorder %s151, 0
    %s154 = sadd.s32 %s153, 1
    %s155 = scalar_select %p152, %s153, %s154
    %p158 = pneg %p152
    %p159 = scmp.eq.s32.totalorder %s17, 1
    %p160 = por %p158, %p159
    %p161 = scmp.ne.s32.totalorder %s153, %s156
    %p162 = scmp.eq.s32.totalorder %s17, 0
    %p163 = por %p161, %p162
    %p164 = scmp.ne.s32.totalorder %s153, %s156
    %p165 = scmp.eq.s32.totalorder %s22, 1
    %p166 = por %p164, %p165
    %p167 = scmp.ne.s32.totalorder %s156, %s157
    %p168 = scmp.eq.s32.totalorder %s22, 0
    %p169 = por %p167, %p168
    %p170 = scmp.ne.s32.totalorder %s156, %s157
    %p171 = scmp.eq.s32.totalorder %s23, 1
    %p172 = por %p170, %p171
    %p174 = scmp.ne.s32.totalorder %s157, %s173
    %p175 = scmp.eq.s32.totalorder %s23, 0
    %p176 = por %p174, %p175
    %p177 = scmp.le.s32.totalorder 1, %s17
    %p178 = scmp.lt.s32.totalorder %s17, 3
    %p179 = pnand %p177, %p178
    %p180 = pneg %p179
    // Predicated region
    $region9: #{mlp_forward.2} parent=5 // pred_check
      _
    $region10: #{mlp_forward.2} parent=5 // pred_check_branch
      %182 = sbr.rel (%p179) target = $region12
    $region11: #{mlp_forward.2} parent=5 // pred_region
      %s183 = ssub.s32 %s17, 1
      // Predicated region
      $region13: #{mlp_forward.2} parent=11 // pred_check
        %p184 = pneg %p78
      $region14: #{mlp_forward.2} parent=11 // pred_check_branch
        %186 = sbr.rel (%p184) target = $region16
      $region15: #{mlp_forward.2} parent=11 // pred_region
        _
      $region16: #{mlp_forward.2} parent=11 // pred_fallthru
        _
      // Predicated region
      $region17: #{mlp_forward.2} parent=11 // pred_check
        %p187 = pneg %p99
      $region18: #{mlp_forward.2} parent=11 // pred_check_branch
        %189 = sbr.rel (%p187) target = $region20
      $region19: #{mlp_forward.2} parent=11 // pred_region
        _
      $region20: #{mlp_forward.2} parent=11 // pred_fallthru
        _
      // Predicated region
      $region21: #{mlp_forward.2} parent=11 // pred_check
        %p190 = pneg %p120
      $region22: #{mlp_forward.2} parent=11 // pred_check_branch
        %192 = sbr.rel (%p190) target = $region24
      $region23: #{mlp_forward.2} parent=11 // pred_region
        _
      $region24: #{mlp_forward.2} parent=11 // pred_fallthru
        _
      // Predicated region
      $region25: #{mlp_forward.2} parent=11 // pred_check
        %p193 = pneg %p141
      $region26: #{mlp_forward.2} parent=11 // pred_check_branch
        %195 = sbr.rel (%p193) target = $region28
      $region27: #{mlp_forward.2} parent=11 // pred_region
        _
      $region28: #{mlp_forward.2} parent=11 // pred_fallthru
        _
    $region12: #{mlp_forward.2} parent=5 // pred_fallthru
      _
    %p196 = scmp.lt.s32.totalorder %s17, 2
    // Predicated region
    $region29: #{mlp_forward.2} parent=5 // pred_check
      %p197 = pneg %p196
    $region30: #{mlp_forward.2} parent=5 // pred_check_branch
      %199 = sbr.rel (%p197) target = $region32
    $region31: #{mlp_forward.2} parent=5 // pred_region
      // Predicated region
      $region33: #{mlp_forward.2} parent=31 // pred_check
        %p200 = pneg %p51
      $region34: #{mlp_forward.2} parent=31 // pred_check_branch
        %202 = sbr.rel (%p200) target = $region36
      $region35: #{mlp_forward.2} parent=31 // pred_region
        %s203 = ssub.s32 1, %s25
        %s204 = smul.u32 128, %s203
        %p205 = scmp.lt.s32.totalorder %s24, 1
        %s206 = scalar_select %p205, %s24, 1
        %p207 = scmp.lt.s32.totalorder %s25, 0
        %s208 = scalar_select %p207, %s25, 0
        %s209 = smul.addr %s206, 2
        %s210 = sadd.s32 %s208, %s209
        %s211 = smul.addr %s210, 4
        %s212 = scalar_lea.vmem %s4, %s211
        %s213 = ssub.s32 1, %s25
        %s214 = smul.u32 128, %s213
      $region36: #{mlp_forward.2} parent=31 // pred_fallthru
        _
    $region32: #{mlp_forward.2} parent=5 // pred_fallthru
      _
    %p215 = scmp.le.s32.totalorder 1, %s17
    %p216 = scmp.lt.s32.totalorder %s17, 3
    %p217 = pnand %p215, %p216
    %p218 = pneg %p217
    // Predicated region
    $region37: #{mlp_forward.2} parent=5 // pred_check
      _
    $region38: #{mlp_forward.2} parent=5 // pred_check_branch
      %220 = sbr.rel (%p217) target = $region40
    $region39: #{mlp_forward.2} parent=5 // pred_region
      #allocation7 [shape = 'u8[4096]{0}', space=vmem, size = 0x1000, dematerialized = true, scoped, tag = 'FusionAdapter Buffer %fusion.1 = bf16[2,12,128]{2,1,0:T(8,128)(2,1)} fusion(%param_4.1, %param_5), kind=kLoop, calls=%fused_computation.3.clone, metadata={op_name="jit(mlp_forward)/jit(_pad)/pad" stack_frame_id=8}']
      %s221 = ssub.s32 %s17, 1
      %s222 = ssub.s32 1, %s27
      %s223 = smul.u32 128, %s222
      %p224 = scmp.lt.s32.totalorder %s26, 1
      %s225 = scalar_select %p224, %s26, 1
      %p226 = scmp.lt.s32.totalorder %s27, 0
      %s227 = scalar_select %p226, %s27, 0
      %s228 = smul.addr %s225, 2
      %s229 = sadd.s32 %s227, %s228
      %s230 = smul.addr %s229, 4
      %s231 = scalar_lea.vmem %s4, %s230
      %p232 = pneg %p57
      %p233 = pneg %p54
      %p234 = pneg %p78
      %p235 = pneg %p75
      %p236 = pneg %p99
      %p237 = pneg %p96
      %p238 = pneg %p120
      %p239 = pneg %p117
      %p240 = pneg %p141
      %p241 = pneg %p138
      %p242 = pneg %p169
      %p243 = pneg %p166
      %p244 = scmp.lt.s32.totalorder %s26, 1
      %s245 = scalar_select %p244, %s26, 1
      %p246 = scmp.lt.s32.totalorder %s27, 0
      %s247 = scalar_select %p246, %s27, 0
      %s248 = smul.addr %s245, 2
      %s249 = sadd.s32 %s247, %s248
      %s250 = smul.addr %s249, 8
      %s251 = scalar_lea.vmem %s6, %s250
      %s252 = ssub.s32 1, %s27
      %s253 = smul.u32 128, %s252
      %p254 = scmp.lt.s32.totalorder %s26, 1
      %s255 = scalar_select %p254, %s26, 1
      %p256 = scmp.lt.s32.totalorder %s27, 0
      %s257 = scalar_select %p256, %s27, 0
      %s258 = smul.addr %s255, 2
      %s259 = sadd.s32 %s257, %s258
      %s260 = smul.addr %s259, 4
      %s261 = scalar_lea.vmem %s4, %s260
      %s262 = ssub.s32 1, %s27
      %s263 = smul.u32 128, %s262
      %p264 = scmp.lt.s32.totalorder %s26, 1
      %s265 = scalar_select %p264, %s26, 1
      %p266 = scmp.lt.s32.totalorder %s27, 0
      %s267 = scalar_select %p266, %s27, 0
      %s268 = smul.addr %s265, 2
      %s269 = sadd.s32 %s267, %s268
      %s270 = smul.addr %s269, 8
      %s271 = scalar_lea.vmem %s6, %s270
      %s272 = ssub.s32 0, %s27
      %p273 = scmp.lt.s32.totalorder %s272, 0
      %s274 = scalar_select %p273, 0, 255
      %s275 = sshrl.u32 %s274, 1
      %s276 = sor.u32 %s274, %s275
      %s277 = sand.u32 %s276, 85
      %s278 = sshrl.u32 %s277, 1
      %s279 = sor.u32 %s277, %s278
      %s280 = sand.u32 51, %s279
      %s281 = sshrl.u32 %s280, 2
      %s282 = sor.u32 %s280, %s281
      %s283 = sand.u32 15, %s282
      %v284 = vld [vmem:[%s261] sm:%s283]
      %v285 = vunpack.c.l.bf16 %v284
      %v286 = vunpack.c.h.bf16 %v284
      %s287 = ssub.s32 0, %s27
      %v288 = vstv %s287
      %vm289 = vcmp.lt.s32.totalorder %v288, 0
      %v290 = vsel %vm289, %v12, %v285
      %v291 = vlaneseq
      %v292 = vshrl.u32 %v291, 7
      %vm294 = vcmp.lt.s32.totalorder %v292, 12
      %v295 = vsel %vm294, %v290, %v12
      %s296 = smul.addr %s27, 128
      %v297 = vlaneseq
      %v298 = vand.u32 %v297, 127
      %v299 = vstv %s296
      %v300 = vadd.s32 %v298, %v299
      %vm301 = vcmp.lt.s32.totalorder %v300, 8
      %v302 = vsel %vm301, %v295, %v12
      %v303 = vpack.c.bf16 0.0, %v302
      %s305 = ssub.s32 16, 1
      %306 = vst [vmem:[#allocation7] sm:%s305] %v303
      %s307 = scalar_lea.vmem %s261, 4
      %s308 = ssub.s32 0, %s27
      %p309 = scmp.lt.s32.totalorder %s308, 0
      %s310 = scalar_select %p309, 0, 255
      %s311 = sshrl.u32 %s310, 1
      %s312 = sor.u32 %s310, %s311
      %s313 = sand.u32 %s312, 85
      %s314 = sshrl.u32 %s313, 1
      %s315 = sor.u32 %s313, %s314
      %s316 = sand.u32 51, %s315
      %s317 = sshrl.u32 %s316, 2
      %s318 = sor.u32 %s316, %s317
      %s319 = sand.u32 15, %s318
      %v320 = vld [vmem:[%s307] sm:%s319]
      %v321 = vunpack.c.l.bf16 %v320
      %v322 = vunpack.c.h.bf16 %v320
      %s323 = ssub.s32 0, %s27
      %v324 = vstv %s323
      %vm325 = vcmp.lt.s32.totalorder %v324, 0
      %v326 = vsel %vm325, %v12, %v321
      %v327 = vlaneseq
      %v328 = vshrl.u32 %v327, 7
      %v329 = vadd.s32 %v328, 8
      %vm330 = vcmp.lt.s32.totalorder %v329, 12
      %v331 = vsel %vm330, %v326, %v12
      %s332 = smul.addr %s27, 128
      %v333 = vlaneseq
      %v334 = vand.u32 %v333, 127
      %v335 = vstv %s332
      %v336 = vadd.s32 %v334, %v335
      %vm337 = vcmp.lt.s32.totalorder %v336, 8
      %v338 = vsel %vm337, %v331, %v12
      %s339 = scalar_lea.vmem [#allocation7], 4
      %v340 = vpack.c.bf16 0.0, %v338
      %s342 = ssub.s32 16, 1
      %343 = vst [vmem:[%s339] sm:%s342] %v340
      %v345 = vld [vmem:[%s0] sm:$0xf]
      %v346 = vld [vmem:[%s0 + $0x4] sm:$0xf]
      %v347 = vld [vmem:[%s0 + $0x8] sm:$0xf]
      %v348 = vld [vmem:[%s0 + $0xc] sm:$0xf]
      %v349 = vld [vmem:[%s1] sm:$0xff]
      %v350 = vld [vmem:[%s1 + $0x8] sm:$0xff]
      %v351 = vld [vmem:[%s1 + $0x10] sm:$0xff]
      %v352 = vld [vmem:[%s1 + $0x18] sm:$0xff]
      %v353 = vld [vmem:[%s2] sm:$0xf]
      %v354 = vld [vmem:[%s2 + $0x4] sm:$0x3]
      %v355 = vld [vmem:[%s3] sm:$0xff]
      %v356 = vld [vmem:[%s3 + $0x8] sm:$0xf]
      %v357 = vld [vmem:[#allocation7] sm:$0xf]
      %v358 = vld [vmem:[#allocation7 + $0x4] sm:$0x3]
      %360 = vset.pattern.permute.xlu0 0
      %361 = vperm.xlu0 %360, %v349
      %v362 = vpop.permute.xlu0 %361
      %365 = vset.pattern.permute.xlu0 0
      %366 = vperm.xlu0 %365, %v350
      %v367 = vpop.permute.xlu0 %366
      %370 = vset.pattern.permute.xlu0 0
      %371 = vperm.xlu0 %370, %v351
      %v372 = vpop.permute.xlu0 %371
      %375 = vset.pattern.permute.xlu0 0
      %376 = vperm.xlu0 %375, %v352
      %v377 = vpop.permute.xlu0 %376
      %v383 = vunpack.c.l.b16 %v345
      %v384 = vunpack.c.l.b16 %v346
      %v385 = vunpack.c.l.b16 %v347
      %v386 = vunpack.c.l.b16 %v348
      %v387 = vpack.c.b16 %v384, %v383
      %v388 = vpack.c.b16 %v386, %v385
      %v391 = vunpack.c.l.b16 %v357
      %v392 = vunpack.c.l.b16 %v358
      %v393 = vpack.c.b16 %v392, %v391
      %vm394 = vcmask 97280
      %v396 = vsel %vm394, %v387, 0
      %v399 = vsel %vm394, %v388, 0
      %vm401 = vcmask 1045504
      %v403 = vsel %vm401, %v393, 0
      %405 = vmatprep.subr.bf16.mxu0 0
      %406 = vmatpush1.bf16.msra.mxu0 0
      %407 = vmatprep.subr.bf16.mxu0 0
      %408 = vmatpush1.bf16.msra.mxu0 0
      %409 = vmatprep.subr.bf16.mxu0 0
      %410 = vmatpush1.bf16.msra.mxu0 0
      %411 = vmatprep.subr.bf16.mxu0 0
      %412 = vmatpush1.bf16.msra.mxu0 0
      %413 = vmatprep.subr.bf16.mxu0 0
      %414 = vmatpush1.bf16.msra.mxu0 0
      %415 = vmatprep.subr.bf16.mxu0 0
      %416 = vmatpush1.bf16.msra.mxu0 0
      %417 = vmatprep.subr.bf16.mxu0 0
      %418 = vmatpush1.bf16.msra.mxu0 0
      %419 = vmatprep.subr.bf16.mxu0 0
      %420 = vmatpush1.bf16.msra.mxu0 %v403
      %421 = vmatprep.subr.bf16.mxu0 0
      %422 = vmatpush2.bf16.msra.mxu0 0
      %423 = vmatprep.subr.bf16.mxu0 0
      %424 = vmatpush2.bf16.msra.mxu0 0
      %425 = vmatprep.subr.bf16.mxu0 0
      %426 = vmatpush2.bf16.msra.mxu0 0
      %427 = vmatprep.subr.bf16.mxu0 0
      %428 = vmatpush2.bf16.msra.mxu0 0
      %429 = vmatprep.subr.bf16.mxu0 0
      %430 = vmatpush2.bf16.msra.mxu0 0
      %431 = vmatprep.subr.bf16.mxu0 0
      %432 = vmatpush2.bf16.msra.mxu0 0
      %433 = vmatprep.subr.bf16.mxu0 0
      %434 = vmatpush2.bf16.msra.mxu0 0
      %435 = vmatprep.subr.bf16.mxu0 0
      %436 = vmatpush2.bf16.msra.mxu0 0
      %437 = vmatprep.mubr.bf16.mxu0 0
      %438 = vmatmul.mubr.bf16.gmra.mxu0 %v396
      %v439 = vpop.f32.mrf.mxu0
      %v440 = vadd.f32 %v362, %v439
      %v441 = vpop.f32.mrf.mxu0
      %v442 = vpop.f32.mrf.mxu0
      %v443 = vadd.f32 %v367, %v442
      %v444 = vpop.f32.mrf.mxu0
      %445 = vmatprep.mubr.bf16.mxu0 0
      %446 = vmatmul.mubr.bf16.gmra.mxu0 %v399
      %v447 = vpop.f32.mrf.mxu0
      %v448 = vadd.f32 %v372, %v447
      %v449 = vpop.f32.mrf.mxu0
      %v450 = vpop.f32.mrf.mxu0
      %v451 = vadd.f32 %v377, %v450
      %v452 = vpop.f32.mrf.mxu0
      %453 = vdwg.mxu0
      %v454 = vmax.f32 %v440, 0.0
      %v455 = vmax.f32 %v443, 0.0
      %v456 = vmax.f32 %v448, 0.0
      %v457 = vmax.f32 %v451, 0.0
      %v458 = vpack.c.bf16 %v455, %v454
      %v459 = vpack.c.bf16 %v457, %v456
      %461 = vset.pattern.permute.xlu0 0
      %462 = vperm.xlu0 %461, %v355
      %v463 = vpop.permute.xlu0 %462
      %466 = vset.pattern.permute.xlu0 0
      %467 = vperm.xlu0 %466, %v356
      %v468 = vpop.permute.xlu0 %467
      %v472 = vunpack.c.l.b16 %v353
      %v473 = vunpack.c.l.b16 %v354
      %v474 = vpack.c.b16 %v473, %v472
      %vm475 = vcmask 261120
      %v477 = vsel %vm475, %v474, 0
      %479 = vmatprep.subr.bf16.mxu0 0
      %480 = vmatpush1.bf16.msra.mxu0 0
      %481 = vmatprep.subr.bf16.mxu0 0
      %482 = vmatpush1.bf16.msra.mxu0 0
      %483 = vmatprep.subr.bf16.mxu0 0
      %484 = vmatpush1.bf16.msra.mxu0 0
      %485 = vmatprep.subr.bf16.mxu0 0
      %486 = vmatpush1.bf16.msra.mxu0 0
      %487 = vmatprep.subr.bf16.mxu0 0
      %488 = vmatpush1.bf16.msra.mxu0 0
      %489 = vmatprep.subr.bf16.mxu0 0
      %490 = vmatpush1.bf16.msra.mxu0 0
      %491 = vmatprep.subr.bf16.mxu0 0
      %492 = vmatpush1.bf16.msra.mxu0 %v459
      %493 = vmatprep.subr.bf16.mxu0 0
      %494 = vmatpush1.bf16.msra.mxu0 %v458
      %495 = vmatprep.subr.bf16.mxu0 0
      %496 = vmatpush2.bf16.msra.mxu0 0
      %497 = vmatprep.subr.bf16.mxu0 0
      %498 = vmatpush2.bf16.msra.mxu0 0
      %499 = vmatprep.subr.bf16.mxu0 0
      %500 = vmatpush2.bf16.msra.mxu0 0
      %501 = vmatprep.subr.bf16.mxu0 0
      %502 = vmatpush2.bf16.msra.mxu0 0
      %503 = vmatprep.subr.bf16.mxu0 0
      %504 = vmatpush2.bf16.msra.mxu0 0
      %505 = vmatprep.subr.bf16.mxu0 0
      %506 = vmatpush2.bf16.msra.mxu0 0
      %507 = vmatprep.subr.bf16.mxu0 0
      %508 = vmatpush2.bf16.msra.mxu0 0
      %509 = vmatprep.subr.bf16.mxu0 0
      %510 = vmatpush2.bf16.msra.mxu0 0
      %511 = vmatprep.mubr.bf16.mxu0 0
      %512 = vmatmul.mubr.bf16.gmra.mxu0 %v477
      %v513 = vpop.f32.mrf.mxu0
      %v514 = vadd.f32 %v463, %v513
      %v515 = vpop.f32.mrf.mxu0
      %v516 = vpop.f32.mrf.mxu0
      %v517 = vadd.f32 %v468, %v516
      %v518 = vpop.f32.mrf.mxu0
      %519 = vdwg.mxu0
      %520 = vst [vmem:[%s271] sm:$0xff] %v514
      %521 = vst [vmem:[%s271 + $0x8] sm:$0xf] %v517
      %p522 = scmp.lt.s32.totalorder %s26, 1
      %s523 = scalar_select %p522, %s26, 1
      %p524 = scmp.lt.s32.totalorder %s27, 0
      %s525 = scalar_select %p524, %s27, 0
      %s526 = smul.addr %s523, 2
      %s527 = sadd.s32 %s525, %s526
      %s528 = smul.addr %s527, 8
      %s529 = scalar_lea.vmem %s6, %s528
      // Predicated region
      $region41: #{mlp_forward.2} parent=39 // pred_check
        %p530 = pneg %p166
      $region42: #{mlp_forward.2} parent=39 // pred_check_branch
        %532 = sbr.rel (%p530) target = $region44
      $region43: #{mlp_forward.2} parent=39 // pred_region
        _
      $region44: #{mlp_forward.2} parent=39 // pred_fallthru
        _
    $region40: #{mlp_forward.2} parent=5 // pred_fallthru
      _
    %p533 = scmp.le.s32.totalorder 2, %s17
    // Predicated region
    $region45: #{mlp_forward.2} parent=5 // pred_check
      %p534 = pneg %p533
    $region46: #{mlp_forward.2} parent=5 // pred_check_branch
      %536 = sbr.rel (%p534) target = $region48
    $region47: #{mlp_forward.2} parent=5 // pred_region
      %s537 = ssub.s32 %s17, 2
      // Predicated region
      $region49: #{mlp_forward.2} parent=47 // pred_check
        %p538 = pneg %p172
      $region50: #{mlp_forward.2} parent=47 // pred_check_branch
        %540 = sbr.rel (%p538) target = $region52
      $region51: #{mlp_forward.2} parent=47 // pred_region
        %p541 = scmp.lt.s32.totalorder %s28, 1
        %s542 = scalar_select %p541, %s28, 1
        %p543 = scmp.lt.s32.totalorder %s29, 0
        %s544 = scalar_select %p543, %s29, 0
        %s545 = smul.addr %s542, 2
        %s546 = sadd.s32 %s544, %s545
        %s547 = smul.addr %s546, 8
        %s548 = scalar_lea.vmem %s6, %s547
      $region52: #{mlp_forward.2} parent=47 // pred_fallthru
        _
    $region48: #{mlp_forward.2} parent=5 // pred_fallthru
      _
  $region6: #{mlp_forward.2} parent=0 // loop_footer
    %s21 = sadd.s32 1, %s17
  $region7: #{mlp_forward.2} parent=0 // loop_footer_branch
    %16 = sbr.rel target = $region3
  $region8: #{mlp_forward.2} parent=0 // loop_exit
    _

</llo_original>
